<compile_context>
chip_gen: v5e
topology: v5e:2x2
jax: 0.10.0
libtpu: 0.0.40
codegen_flags: <defaults>
</compile_context>

<pallas_src>
import functools

import jax
import jax.numpy as jnp
from jax.experimental import pallas as pl
from jax.experimental.pallas import tpu as pltpu


def _round_up(v, m):
    return ((v + m - 1) // m) * m


def _label_smoothing_kernel(x_ref, tgt_ref, out_ref, acc_ref,
                            *, confidence, smoothing, block_n, total_n):
    s = pl.program_id(0)          # split (maps to a TensorCore when core_parallel)
    i = pl.program_id(1)          # sequential step within this split
    steps = pl.num_programs(1)

    @pl.when(i == 0)
    def _():
        acc_ref[...] = jnp.zeros_like(acc_ref)

    # Native-dtype tile streamed from HBM; all math in f32 (keeps numerics, and
    # v5e has no bf16 VPU/EUP anyway).
    x = x_ref[...].astype(jnp.float32)               # (block_n, C)
    tn, c = x.shape

    # Numerically stable logsumexp along the class (lane) axis.
    m = jnp.max(x, axis=-1, keepdims=True)
    lse = jnp.log(jnp.sum(jnp.exp(x - m), axis=-1, keepdims=True)) + m

    # Fused loss. With w = confidence*onehot(target) + smoothing/C (sum(w) == 1):
    #   loss_row = -sum(w * (x - lse)) = lse - sum(w * x)
    #            = lse - confidence * x[target] - (smoothing/C) * sum(x)
    # Reductions run on the XLU; only one select pass on the VPU.
    col = jax.lax.broadcasted_iota(jnp.int32, (tn, c), 1)
    tgt = tgt_ref[...]                               # (block_n, 1) int32
    x_at_tgt = jnp.sum(jnp.where(col == tgt, x, 0.0), axis=-1, keepdims=True)
    x_sum = jnp.sum(x, axis=-1, keepdims=True)
    loss = lse - (confidence * x_at_tgt + (smoothing / c) * x_sum)   # (block_n, 1)

    # Mask rows beyond the true batch (batch was padded to tile evenly).
    row = jax.lax.broadcasted_iota(jnp.int32, (tn, 1), 0)
    global_row = (s * steps + i) * block_n + row
    loss = jnp.where(global_row < total_n, loss, 0.0)

    # Per-row vector accumulator; no cross-sublane reduce per step.
    acc_ref[...] = acc_ref[...] + loss

    @pl.when(i == steps - 1)
    def _():
        out_ref[...] = jnp.sum(acc_ref[...], axis=0, keepdims=True)   # (1, 1)


def label_smoothing_loss(x, target, smoothing=0.1, *,
                         block_n=None, num_splits=1, core_parallel=False):
    """x: (N, C) logits (f32 or bf16); target: (N,) int class ids. Returns scalar."""
    n, c = x.shape
    confidence = 1.0 - smoothing

    # Keep bf16 in bf16 (halves the streamed HBM bytes); anything else -> f32.
    if x.dtype not in (jnp.bfloat16, jnp.float32):
        x = x.astype(jnp.float32)
    tgt = target.astype(jnp.int32).reshape(n, 1)

    # Tile sizing: ~4 MiB of f32 working set per x block; multiple of 16 rows
    # (bf16 packs (16,128)); capped at 4096 rows so the lane-padded
    # (block_n, 1) target / accumulator stay small; never larger than batch.
    if block_n is None:
        f32_budget = 4 << 20
        block_n = max(16, min(4096, f32_budget // (4 * c)))
    block_n = max(16, (block_n // 16) * 16)
    block_n = min(block_n, _round_up(n, 16))

    # Pad the batch so it tiles evenly over the (num_splits, steps) grid.
    n_pad = _round_up(n, block_n * num_splits)
    if n_pad != n:
        x = jnp.pad(x, ((0, n_pad - n), (0, 0)))
        tgt = jnp.pad(tgt, ((0, n_pad - n), (0, 0)))
    steps = n_pad // (block_n * num_splits)

    kernel = functools.partial(
        _label_smoothing_kernel,
        confidence=float(confidence), smoothing=float(smoothing),
        block_n=block_n, total_n=n)

    # VMEM budget scaled with the actual tile: multi-buffered x, ~4 live f32
    # full-tile temporaries, lane-padded target buffers, plus slack.
    x_block_bytes = block_n * c * jnp.dtype(x.dtype).itemsize
    f32_block_bytes = block_n * c * 4
    x_buffers = 3 if (x_block_bytes <= (1 << 20) and steps >= 8) else 2
    vmem_needed = (x_buffers * x_block_bytes + 4 * f32_block_bytes
                   + x_buffers * block_n * 512 + (2 << 20))
    vmem_limit = int(min(100 << 20, max(48 << 20, vmem_needed)))
    # TODO(synk): when vmem_needed exceeds ~48 MiB (huge C), switch to a
    # C-chunked online logsumexp so v7x (64 MiB physical VMEM) stays pipelined.

    x_index_map = lambda s, i, _st=steps: (s * _st + i, 0)
    tgt_index_map = lambda s, i, _st=steps: (s * _st + i, 0)
    if x_buffers == 3:
        # Extra buffer hides DMA issue/wait latency when tiles are small and
        # the sequential step count is long.
        x_spec = pl.BlockSpec((block_n, c), x_index_map,
                              pipeline_mode=pl.Buffered(3))
    else:
        x_spec = pl.BlockSpec((block_n, c), x_index_map)

    # Leading (split) axis: CORE_PARALLEL shards it across TensorCores on
    # multi-TC chips (v7x); plain "parallel" elsewhere (no-op on 1-TC chips).
    split_sem = pltpu.CORE_PARALLEL if core_parallel else "parallel"

    partials = pl.pallas_call(
        kernel,
        out_shape=jax.ShapeDtypeStruct((num_splits, 1), jnp.float32),
        grid_spec=pltpu.PrefetchScalarGridSpec(
            num_scalar_prefetch=0,
            grid=(num_splits, steps),
            in_specs=[x_spec,
                      pl.BlockSpec((block_n, 1), tgt_index_map)],
            out_specs=pl.BlockSpec((1, 1), lambda s, i: (s, 0)),
            scratch_shapes=[pltpu.VMEM((block_n, 1), jnp.float32)],
        ),
        compiler_params=pltpu.CompilerParams(
            dimension_semantics=(split_sem, "arbitrary"),
            vmem_limit_bytes=vmem_limit),
    )(x, tgt)

    return jnp.sum(partials) / jnp.float32(n)


def _reference(x, target, smoothing):
    logprobs = jax.nn.log_softmax(x.astype(jnp.float32), axis=-1)
    nll = -jnp.take_along_axis(logprobs, target[:, None], axis=-1)[:, 0]
    smooth = -jnp.mean(logprobs, axis=-1)
    return jnp.mean((1.0 - smoothing) * nll + smoothing * smooth)


if __name__ == "__main__":
    key = jax.random.PRNGKey(0)
    kx, kt, kx2, kt2 = jax.random.split(key, 4)
    smoothing = 0.1

    # Small f32 case (single tile, defaults).
    N, C = 16, 64
    x = jax.random.normal(kx, (N, C), dtype=jnp.float32)
    target = jax.random.randint(kt, (N,), 0, C, dtype=jnp.int32)
    loss = jax.block_until_ready(
        label_smoothing_loss(x, target, smoothing=smoothing))
    ref = _reference(x, target, smoothing)
    assert jnp.allclose(loss, ref, rtol=1e-5, atol=1e-5), (loss, ref)

    # Ragged batch + multi-step accumulation + 2-way split + bf16 streaming path.
    N2, C2 = 50, 96
    x2 = jax.random.normal(kx2, (N2, C2), dtype=jnp.float32).astype(jnp.bfloat16)
    target2 = jax.random.randint(kt2, (N2,), 0, C2, dtype=jnp.int32)
    loss2 = jax.block_until_ready(
        label_smoothing_loss(x2, target2, smoothing=smoothing,
                             block_n=16, num_splits=2))
    ref2 = _reference(x2, target2, smoothing)   # same bf16 inputs, f32 math
    assert jnp.allclose(loss2, ref2, rtol=1e-5, atol=1e-5), (loss2, ref2)

    print("KERNEL_OK")
</pallas_src>

<mosaic_0001>
module attributes {stable_mosaic.version = 11 : i64} {
  func.func @_label_smoothing_kernel(%arg0: i32, %arg1: i32, %arg2: memref<16x64xf32, #tpu.memory_space<vmem>>, %arg3: memref<16x1xi32, #tpu.memory_space<vmem>>, %arg4: memref<1x1xf32, #tpu.memory_space<vmem>>, %arg5: memref<16x1xf32, #tpu.memory_space<vmem>>) attributes {dimension_semantics = [#tpu.dimension_semantics<parallel>, #tpu.dimension_semantics<arbitrary>], iteration_bounds = array<i64: 1, 1>, scalar_prefetch = 0 : i64, scratch_operands = 1 : i64, tpu.core_type = #tpu.core_type<tc>, window_params = [{transform_indices = @transform_0, window_bounds = array<i64: 16, 64>}, {transform_indices = @transform_1, window_bounds = array<i64: 16, 1>}, {transform_indices = @transform_2, window_bounds = array<i64: 1, 1>}]} {
    %c0_i32 = arith.constant 0 : i32
    %0 = arith.cmpi eq, %arg1, %c0_i32 : i32
    %1 = arith.extui %0 : i1 to i32
    %c0_i32_0 = arith.constant 0 : i32
    %2 = arith.cmpi ne, %1, %c0_i32_0 : i32
    scf.if %2 {
      %cst_18 = arith.constant 0.000000e+00 : f32
      %45 = vector.broadcast %cst_18 : f32 to vector<16x1xf32>
      %c0_19 = arith.constant 0 : index
      %c0_20 = arith.constant 0 : index
      %46 = vector.load %arg5[%c0_19, %c0_20] : memref<16x1xf32, #tpu.memory_space<vmem>>, vector<16x1xf32>
      tpu.vector_store %arg5[%c0_19, %c0_20], %45 {strides = array<i32>} : memref<16x1xf32, #tpu.memory_space<vmem>>, vector<16x1xf32>,
    } else {
    }
    %c0 = arith.constant 0 : index
    %c0_1 = arith.constant 0 : index
    %3 = vector.load %arg2[%c0, %c0_1] : memref<16x64xf32, #tpu.memory_space<vmem>>, vector<16x64xf32>
    %cst = arith.constant dense<0xFF800000> : vector<16xf32>
    %4 = vector.multi_reduction <maximumf>, %3, %cst [1] : vector<16x64xf32> to vector<16xf32>
    %5 = vector.shape_cast %4 : vector<16xf32> to vector<16x1xf32>
    %6 = vector.broadcast %5 : vector<16x1xf32> to vector<16x64xf32>
    %7 = arith.subf %3, %6 : vector<16x64xf32>
    %8 = math.exp %7 : vector<16x64xf32>
    %cst_2 = arith.constant dense<0.000000e+00> : vector<16xf32>
    %9 = vector.multi_reduction <add>, %8, %cst_2 [1] : vector<16x64xf32> to vector<16xf32>
    %10 = vector.shape_cast %9 : vector<16xf32> to vector<16x1xf32>
    %11 = math.log %10 : vector<16x1xf32>
    %12 = arith.addf %11, %5 : vector<16x1xf32>
    %13 = tpu.iota {dimensions = array<i32: 1>} : vector<16x64xi32>
    %c0_3 = arith.constant 0 : index
    %c0_4 = arith.constant 0 : index
    %14 = vector.load %arg3[%c0_3, %c0_4] : memref<16x1xi32, #tpu.memory_space<vmem>>, vector<16x1xi32>
    %15 = vector.broadcast %14 : vector<16x1xi32> to vector<16x64xi32>
    %16 = arith.cmpi eq, %13, %15 : vector<16x64xi32>
    %cst_5 = arith.constant 0.000000e+00 : f32
    %17 = vector.broadcast %cst_5 : f32 to vector<16x64xf32>
    %18 = arith.select %16, %3, %17 : vector<16x64xi1>, vector<16x64xf32>
    %cst_6 = arith.constant dense<0.000000e+00> : vector<16xf32>
    %19 = vector.multi_reduction <add>, %18, %cst_6 [1] : vector<16x64xf32> to vector<16xf32>
    %20 = vector.shape_cast %19 : vector<16xf32> to vector<16x1xf32>
    %cst_7 = arith.constant dense<0.000000e+00> : vector<16xf32>
    %21 = vector.multi_reduction <add>, %3, %cst_7 [1] : vector<16x64xf32> to vector<16xf32>
    %22 = vector.shape_cast %21 : vector<16xf32> to vector<16x1xf32>
    %cst_8 = arith.constant 0.899999976 : f32
    %23 = vector.broadcast %cst_8 : f32 to vector<16x1xf32>
    %24 = arith.mulf %23, %20 : vector<16x1xf32>
    %cst_9 = arith.constant 1.562500e-03 : f32
    %25 = vector.broadcast %cst_9 : f32 to vector<16x1xf32>
    %26 = arith.mulf %25, %22 : vector<16x1xf32>
    %27 = arith.addf %24, %26 : vector<16x1xf32>
    %28 = arith.subf %12, %27 : vector<16x1xf32>
    %29 = tpu.iota {dimensions = array<i32: 0>} : vector<16x1xi32>
    %c1_i32 = arith.constant 1 : i32
    %30 = arith.muli %arg0, %c1_i32 : i32
    %31 = arith.addi %30, %arg1 : i32
    %c16_i32 = arith.constant 16 : i32
    %32 = arith.muli %31, %c16_i32 : i32
    %33 = vector.broadcast %32 : i32 to vector<16x1xi32>
    %34 = arith.addi %33, %29 : vector<16x1xi32>
    %c16_i32_10 = arith.constant 16 : i32
    %35 = vector.broadcast %c16_i32_10 : i32 to vector<16x1xi32>
    %36 = arith.cmpi slt, %34, %35 : vector<16x1xi32>
    %cst_11 = arith.constant 0.000000e+00 : f32
    %37 = vector.broadcast %cst_11 : f32 to vector<16x1xf32>
    %38 = arith.select %36, %28, %37 : vector<16x1xi1>, vector<16x1xf32>
    %c0_12 = arith.constant 0 : index
    %c0_13 = arith.constant 0 : index
    %39 = vector.load %arg5[%c0_12, %c0_13] : memref<16x1xf32, #tpu.memory_space<vmem>>, vector<16x1xf32>
    %40 = arith.addf %39, %38 : vector<16x1xf32>
    %c0_14 = arith.constant 0 : index
    %c0_15 = arith.constant 0 : index
    %41 = vector.load %arg5[%c0_14, %c0_15] : memref<16x1xf32, #tpu.memory_space<vmem>>, vector<16x1xf32>
    tpu.vector_store %arg5[%c0_14, %c0_15], %40 {strides = array<i32>} : memref<16x1xf32, #tpu.memory_space<vmem>>, vector<16x1xf32>,
    %c0_i32_16 = arith.constant 0 : i32
    %42 = arith.cmpi eq, %arg1, %c0_i32_16 : i32
    %43 = arith.extui %42 : i1 to i32
    %c0_i32_17 = arith.constant 0 : i32
    %44 = arith.cmpi ne, %43, %c0_i32_17 : i32
    scf.if %44 {
      %c0_18 = arith.constant 0 : index
      %c0_19 = arith.constant 0 : index
      %45 = vector.load %arg5[%c0_18, %c0_19] : memref<16x1xf32, #tpu.memory_space<vmem>>, vector<16x1xf32>
      %cst_20 = arith.constant dense<0.000000e+00> : vector<1xf32>
      %46 = vector.multi_reduction <add>, %45, %cst_20 [0] : vector<16x1xf32> to vector<1xf32>
      %47 = vector.shape_cast %46 : vector<1xf32> to vector<1x1xf32>
      %c0_21 = arith.constant 0 : index
      %c0_22 = arith.constant 0 : index
      %48 = vector.load %arg4[%c0_21, %c0_22] : memref<1x1xf32, #tpu.memory_space<vmem>>, vector<1x1xf32>
      tpu.vector_store %arg4[%c0_21, %c0_22], %47 {strides = array<i32>} : memref<1x1xf32, #tpu.memory_space<vmem>>, vector<1x1xf32>,
    } else {
    }
    return
  }
  func.func @transform_0(%arg0: i32, %arg1: i32) -> (i32, i32) {
    %c1_i32 = arith.constant 1 : i32
    %0 = arith.muli %arg0, %c1_i32 : i32
    %1 = arith.addi %0, %arg1 : i32
    %c0_i32 = arith.constant 0 : i32
    %c0_i32_0 = arith.constant 0 : i32
    return %1, %c0_i32 : i32, i32
  }
  func.func @transform_1(%arg0: i32, %arg1: i32) -> (i32, i32) {
    %c1_i32 = arith.constant 1 : i32
    %0 = arith.muli %arg0, %c1_i32 : i32
    %1 = arith.addi %0, %arg1 : i32
    %c0_i32 = arith.constant 0 : i32
    %c0_i32_0 = arith.constant 0 : i32
    return %1, %c0_i32 : i32, i32
  }
  func.func @transform_2(%arg0: i32, %arg1: i32) -> (i32, i32) {
    %c0_i32 = arith.constant 0 : i32
    %c0_i32_0 = arith.constant 0 : i32
    return %arg0, %c0_i32 : i32, i32
  }
}

</mosaic_0001>

<llo_original>
// kernel: tpu_custom_call.1
$region0: #{tpu_custom_call.1}
  #allocation0 [shape = 'u32[]', space=smem, size = 0x4, offset = 0x4, fixed_abs, tag = 'smem constant byte address 0x4 - core index']
  #allocation1 [shape = 'u32[72,128]{1,0:T(1,128)}', space=vmem, size = 0x9000, scoped, tag = 'internal scratch']
  #allocation2 [shape = 'f32[16,1]{1,0:T(8,128)}', space=vmem, size = 0x2000, scoped, tag = 'scratch operand']
  %s0 = inlined_call_operand.vmem [shape: f32[16,64], index: 0, kind: input, shape index: {}]
  %s1 = inlined_call_operand.vmem [shape: s32[16,1], index: 1, kind: input, shape index: {}]
  %s2 = inlined_call_operand.hbm [shape: f32[1,1], index: 2, kind: output, shape index: {}]
  %s3 = sld [smem:[#allocation0]]
  $region26: #{tpu_custom_call.1} parent=0
    _
  %s5 = ssub.s32 1, %s3
  %s6 = scalar_select 0, %s5, %s3
  $region1: #{tpu_custom_call.1} parent=0
    #allocation3 [shape = 'u8[512]{0}', space=vmem, size = 0x400, scoped, tag = 'output window, operand 0, single buffered']
    #allocation4 [shape = 's32[1]{0}', space=sflag, size = 0x4, scoped, tag = 'scoped memory for tpu_custom_call.1']
    %7 = vsyncpa [#allocation4], 0
    // Predicated region
    $region2: #{tpu_custom_call.1} parent=1 // pred_check
      _
    $region3: #{tpu_custom_call.1} parent=1 // pred_check_branch
      %9 = sbr.rel (0) target = $region5
    $region4: #{tpu_custom_call.1} parent=1 // pred_region
      %s10 = sadd.s32 0, 0
      %s11 = smul.u32 2, %s10
      %p12 = scmp.lt.s32.totalorder %s11, 1
      %s13 = scalar_select %p12, %s11, 1
      %s14 = smul.addr %s13, 8
      %s15 = scalar_lea.vmem %s0, %s14
      %s16 = sadd.s32 0, 0
      %s17 = smul.u32 2, %s16
    $region5: #{tpu_custom_call.1} parent=1 // pred_fallthru
      _
    // Predicated region
    $region6: #{tpu_custom_call.1} parent=1 // pred_check
      _
    $region7: #{tpu_custom_call.1} parent=1 // pred_check_branch
      %19 = sbr.rel (0) target = $region9
    $region8: #{tpu_custom_call.1} parent=1 // pred_region
      %s20 = sadd.s32 0, 0
      %s21 = smul.u32 2, %s20
      %p22 = scmp.lt.s32.totalorder %s21, 1
      %s23 = scalar_select %p22, %s21, 1
      %s24 = smul.addr %s23, 8
      %s25 = scalar_lea.vmem %s1, %s24
      %s26 = sadd.s32 0, 0
      %s27 = smul.u32 2, %s26
    $region9: #{tpu_custom_call.1} parent=1 // pred_fallthru
      _
    %s28 = sadd.s32 0, 0
    %s29 = smul.u32 2, %s28
    %p30 = scmp.lt.s32.totalorder %s29, 1
    %s31 = scalar_select %p30, %s29, 1
    %s32 = smul.addr %s31, 8
    %s33 = scalar_lea.vmem %s0, %s32
    %s34 = sadd.s32 0, 0
    %s35 = smul.u32 2, %s34
    %p36 = scmp.lt.s32.totalorder %s35, 1
    %s37 = scalar_select %p36, %s35, 1
    %s38 = smul.addr %s37, 8
    %s39 = scalar_lea.vmem %s1, %s38
    %s40 = sadd.s32 0, 0
    %s41 = smul.u32 2, %s40
    %p42 = scmp.lt.s32.totalorder %s41, 1
    %s43 = scalar_select %p42, %s41, 1
    %s44 = smul.addr %s43, 8
    %s45 = scalar_lea.vmem %s0, %s44
    %s46 = sadd.s32 0, 0
    %s47 = smul.u32 2, %s46
    %s48 = sadd.s32 0, 0
    %s49 = smul.u32 2, %s48
    %p50 = scmp.lt.s32.totalorder %s49, 1
    %s51 = scalar_select %p50, %s49, 1
    %s52 = smul.addr %s51, 8
    %s53 = scalar_lea.vmem %s1, %s52
    %s54 = sadd.s32 0, 0
    %s55 = smul.u32 2, %s54
    %p56 = scmp.eq.s32.totalorder 0, 0
    // Predicated region
    $region10: #{tpu_custom_call.1} parent=1 // pred_check
      %p57 = pneg %p56
    $region11: #{tpu_custom_call.1} parent=1 // pred_check_branch
      %59 = sbr.rel (%p57) target = $region13
    $region12: #{tpu_custom_call.1} parent=1 // pred_region
      %vm60 = vcmask 7168
      %61 = vst.msk [vmem:[#allocation2] sm:$0xff] %vm60, 0.0
      %62 = vst.msk [vmem:[#allocation2 + $0x8] sm:$0xff] %vm60, 0.0
    $region13: #{tpu_custom_call.1} parent=1 // pred_fallthru
      _
    %v63 = vld [vmem:[%s45] sm:$0xff]
    %v64 = vld [vmem:[%s45 + $0x8] sm:$0xff]
    %vm65 = vcmask 523264
    %v66 = vsel %vm65, %v63, -inf
    %67 = vmax.xlane.f32.xlu0 %v66
    %v68 = vpop.xlane.xlu0 %67
    %v69 = vsel %vm65, %v64, -inf
    %70 = vmax.xlane.f32.xlu0 %v69
    %v71 = vpop.xlane.xlu0 %70
    %v72 = vsub.f32 %v63, %v68
    %v73 = vsub.f32 %v64, %v71
    %v74 = vmul.f32 %v72, 1.442695
    %v75 = vpow.pop %v74
    %v76 = vmul.f32 %v73, 1.442695
    %v77 = vpow.pop %v76
    %v78 = vsel %vm65, %v75, 0.0
    %79 = vadd.xlane.f32.xlu0 %v78
    %v80 = vpop.xlane.xlu0 %79
    %v81 = vsel %vm65, %v77, 0.0
    %82 = vadd.xlane.f32.xlu0 %v81
    %v83 = vpop.xlane.xlu0 %82
    %v84 = vlog2.pop %v80
    %v85 = vmul.f32 %v84, 0.6931472
    %v86 = vlog2.pop %v83
    %v87 = vmul.f32 %v86, 0.6931472
    %v88 = vadd.f32 %v85, %v68
    %v89 = vadd.f32 %v87, %v71
    %v90 = vlaneseq
    %v91 = vand.u32 %v90, 127
    %v92 = vld [vmem:[%s53] sm:$0xff]
    %v93 = vld [vmem:[%s53 + $0x8] sm:$0xff]
    %94 = vset.pattern.permute.xlu0 0
    %95 = vperm.xlu0 %94, %v92
    %v96 = vpop.permute.xlu0 %95
    %97 = vset.pattern.permute.xlu0 0
    %98 = vperm.xlu0 %97, %v93
    %v99 = vpop.permute.xlu0 %98
    %vm100 = vcmp.eq.s32.totalorder %v91, %v96
    %vm101 = vcmp.eq.s32.totalorder %v91, %v99
    %v102 = vsel %vm100, %v63, 0.0
    %v103 = vsel %vm101, %v64, 0.0
    %v104 = vsel %vm65, %v102, 0.0
    %105 = vadd.xlane.f32.xlu0 %v104
    %v106 = vpop.xlane.xlu0 %105
    %v107 = vsel %vm65, %v103, 0.0
    %108 = vadd.xlane.f32.xlu0 %v107
    %v109 = vpop.xlane.xlu0 %108
    %v110 = vsel %vm65, %v63, 0.0
    %111 = vadd.xlane.f32.xlu0 %v110
    %v112 = vpop.xlane.xlu0 %111
    %v113 = vsel %vm65, %v64, 0.0
    %114 = vadd.xlane.f32.xlu0 %v113
    %v115 = vpop.xlane.xlu0 %114
    %v116 = vmul.f32 %v106, 0.9
    %v117 = vmul.f32 %v109, 0.9
    %v118 = vmul.f32 %v112, 0.0015625
    %v119 = vmul.f32 %v115, 0.0015625
    %v120 = vadd.f32 %v116, %v118
    %v121 = vadd.f32 %v117, %v119
    %v122 = vsub.f32 %v88, %v120
    %v123 = vsub.f32 %v89, %v121
    %v124 = vlaneseq
    %v125 = vshrl.u32 %v124, 7
    %v126 = vadd.s32 %v125, 8
    %s127 = sadd.s32 0, 0
    %s128 = smul.u32 %s127, 16
    %v129 = vstv %s128
    %v130 = vadd.s32 %v129, %v125
    %v131 = vadd.s32 %v129, %v126
    %vm132 = vcmp.lt.s32.totalorder %v130, 16
    %vm133 = vcmp.lt.s32.totalorder %v131, 16
    %v134 = vsel %vm132, %v122, 0.0
    %v135 = vsel %vm133, %v123, 0.0
    %v136 = vld [vmem:[#allocation2] sm:$0xff]
    %v137 = vld [vmem:[#allocation2 + $0x8] sm:$0xff]
    %v138 = vadd.f32 %v136, %v134
    %v139 = vadd.f32 %v137, %v135
    %vm140 = vcmask 7168
    %141 = vst.msk [vmem:[#allocation2] sm:$0xff] %vm140, %v138
    %142 = vst.msk [vmem:[#allocation2 + $0x8] sm:$0xff] %vm140, %v139
    // Predicated region
    $region14: #{tpu_custom_call.1} parent=1 // pred_check
      %p143 = pneg %p56
    $region15: #{tpu_custom_call.1} parent=1 // pred_check_branch
      %145 = sbr.rel (%p143) target = $region17
    $region16: #{tpu_custom_call.1} parent=1 // pred_region
      %v146 = vld [vmem:[#allocation2] sm:$0xff]
      %v147 = vld [vmem:[#allocation2 + $0x8] sm:$0xff]
      %v148 = vsel %vm140, %v146, 0.0
      %v149 = vsel %vm140, %v147, 0.0
      %v150 = vadd.f32 %v148, %v149
      %v151 = vrot.slane %v150, 4
      %v152 = vadd.f32 %v150, %v151
      %v153 = vrot.slane %v152, 2
      %v154 = vadd.f32 %v152, %v153
      %v155 = vrot.slane %v154, 1
      %v156 = vadd.f32 %v154, %v155
      %vm157 = vcmask 0
      %158 = vst.msk [vmem:[#allocation3] sm:$0x1] %vm157, %v156
    $region17: #{tpu_custom_call.1} parent=1 // pred_fallthru
      _
    // Predicated region
    $region18: #{tpu_custom_call.1} parent=1 // pred_check
      _
    $region19: #{tpu_custom_call.1} parent=1 // pred_check_branch
      %160 = sbr.rel (0) target = $region21
    $region20: #{tpu_custom_call.1} parent=1 // pred_region
      %162 = vsyncadd [#allocation4], 0
      %s164 = sshll.u32 [#allocation3], 4
      %s165 = int_to_ptr.vmem [resolvable:$true] %s164
      %s166 = sshll.u32 %s2, 4
      %s167 = int_to_ptr.hbm [resolvable:$true] %s166
      %169 = dma.vmem_to_hbm [thread:$0]  %s165, 16, %s167, [#allocation4]
    $region21: #{tpu_custom_call.1} parent=1 // pred_fallthru
      _
    // Predicated region
    $region22: #{tpu_custom_call.1} parent=1 // pred_check
      _
    $region23: #{tpu_custom_call.1} parent=1 // pred_check_branch
      %171 = sbr.rel (0) target = $region25
    $region24: #{tpu_custom_call.1} parent=1 // pred_region
      %173 = dma.done [#allocation4], 16
    $region25: #{tpu_custom_call.1} parent=1 // pred_fallthru
      _
    %174 = vsyncpa [#allocation4], 1

</llo_original>
